<compile_context>
chip_gen: v5e
topology: v5e:2x2
jax: 0.10.0
libtpu: 0.0.40
codegen_flags: <defaults>
</compile_context>

<pallas_src>
import math

import jax
import jax.numpy as jnp
from jax.experimental import pallas as pl
from jax.experimental.pallas import tpu as pltpu

_LANE = 128
_MAX_TILE_BYTES = 4 << 20       # per-buffer tile cap (4 MiB)
_VMEM_LIMIT_BYTES = 32 << 20    # explicit scoped-VMEM limit (fits all generations)


def _copy_kernel(x_ref, o_ref):
    # Pure identity copy of the VMEM-resident tile (mem-bound; no compute).
    o_ref[...] = x_ref[...]


def _sublane_multiple(dtype):
    """Packed-sublane multiple: 8 for 32-bit, 16 for bf16/f16, 32 for int8/fp8."""
    itemsize = jnp.dtype(dtype).itemsize
    if itemsize >= 4:
        return 8
    return 8 * (4 // itemsize)


def _round_up(x, m):
    return ((x + m - 1) // m) * m


def _choose_cols(n_elems):
    """Widest lane-dense column count in {2048..128} dividing n_elems, else None."""
    for cols in (2048, 1024, 512, 256, 128):
        if n_elems % cols == 0:
            return cols
    return None


def _pick_row_tile(rows, cols, itemsize, sublane):
    """Row tile (multiple of `sublane`, <= cap) + cdiv grid, >=2 steps if possible."""
    bytes_per_row = max(1, cols * itemsize)
    cap_rows = max(sublane, (_MAX_TILE_BYTES // bytes_per_row) // sublane * sublane)
    tm = min(_round_up(rows, sublane), cap_rows)
    # If everything would fit in one grid step but can be split, use >= 2 steps
    # so the "parallel" axis actually shards across both TensorCores (v7x).
    if tm >= rows and rows > sublane:
        tm = min(tm, _round_up(pl.cdiv(rows, 2), sublane))
    grid = pl.cdiv(rows, tm)
    return tm, grid


def _flat_copy_pallas(flat_in):
    """Materialize flatten(inputs, 1) once via a tiled Pallas identity copy."""
    B, F = flat_in.shape
    n = B * F
    dtype = flat_in.dtype
    itemsize = jnp.dtype(dtype).itemsize
    sublane = _sublane_multiple(dtype)

    cost = pl.CostEstimate(flops=0, transcendentals=0,
                           bytes_accessed=2 * n * itemsize)
    cparams = pltpu.CompilerParams(
        dimension_semantics=("parallel",),
        vmem_limit_bytes=_VMEM_LIMIT_BYTES,
    )

    cols = _choose_cols(n)
    if cols is not None:
        # Lane-dense slab: metadata-only reshape to (rows, cols), cols % 128 == 0.
        rows = n // cols
        x2d = flat_in.reshape(rows, cols)
        out2d_shape = (rows, cols)
    else:
        # Total element count not a multiple of 128: keep (B, F); the last dim is
        # full-extent (exempt from the 128 rule) and we tile over rows instead of
        # using a single whole-array block (bounds VMEM for large inputs).
        rows, cols = B, F
        x2d = flat_in
        out2d_shape = (B, F)

    if rows < sublane:
        # Tiny row count: full-extent row block (exempt from the sublane rule).
        tm, grid = rows, 1
    else:
        tm, grid = _pick_row_tile(rows, cols, itemsize, sublane)

    out2d = pl.pallas_call(
        _copy_kernel,
        out_shape=jax.ShapeDtypeStruct(out2d_shape, dtype),
        grid=(grid,),
        in_specs=[pl.BlockSpec((tm, cols), lambda i: (i, 0))],
        out_specs=pl.BlockSpec((tm, cols), lambda i: (i, 0)),
        compiler_params=cparams,
        cost_estimate=cost,
    )(x2d)
    return out2d.reshape(B, F)


def debug_model_forward(inputs, feature=True):
    """JAX/Pallas equivalent of DebugModel.forward.

    inputs: (B, ...) array (e.g. NCHW).
    Returns (flat, flat) if feature else flat, with flat of shape (B, prod(rest)).
    """
    B = inputs.shape[0]
    F = math.prod(inputs.shape[1:])
    # torch.flatten(x, start_dim=1) on contiguous input == metadata-only reshape.
    flat_in = inputs.reshape(B, F)

    # Single materialization (1 HBM read + 1 HBM write) through the Pallas copy.
    # (Pure-reshape elision would be even cheaper, but a kernel is required here.)
    flat = _flat_copy_pallas(flat_in)

    if feature:
        # PyTorch returns the same tensor aliased twice; returning the one kernel
        # output twice is semantically identical and avoids a second HBM write.
        return flat, flat
    return flat


if __name__ == "__main__":
    # DebugModel has no parameters, so nothing to initialize.
    key = jax.random.PRNGKey(0)
    x = jax.random.normal(key, (2, 4, 16, 16), dtype=jnp.float32)  # NCHW

    out_a, out_b = debug_model_forward(x, feature=True)
    out_a = jax.block_until_ready(out_a)
    out_b = jax.block_until_ready(out_b)

    ref = x.reshape(x.shape[0], -1)
    assert out_a.shape == (2, 4 * 16 * 16)
    assert out_b.shape == (2, 4 * 16 * 16)
    assert jnp.array_equal(out_a, ref)
    assert jnp.array_equal(out_b, ref)

    # feature=False path returns a single flat tensor.
    out_single = jax.block_until_ready(debug_model_forward(x, feature=False))
    assert jnp.array_equal(out_single, ref)

    # Exercise the non-128-divisible fallback path (row-tiled, full-extent cols).
    x2 = jax.random.normal(jax.random.PRNGKey(0), (2, 3, 5, 7), dtype=jnp.float32)
    o2a, o2b = debug_model_forward(x2, feature=True)
    o2a = jax.block_until_ready(o2a)
    assert jnp.array_equal(o2a, x2.reshape(2, -1))
    assert jnp.array_equal(o2b, x2.reshape(2, -1))

    # Exercise the multi-step parallel grid (>= 2 row tiles).
    x3 = jax.random.normal(jax.random.PRNGKey(0), (8, 4, 32, 32), dtype=jnp.float32)
    o3 = jax.block_until_ready(debug_model_forward(x3, feature=False))
    assert jnp.array_equal(o3, x3.reshape(8, -1))

    print("KERNEL_OK")
</pallas_src>

<mosaic_0001>
module attributes {stable_mosaic.version = 11 : i64} {
  func.func @_copy_kernel(%arg0: i32, %arg1: memref<1x2048xf32, #tpu.memory_space<vmem>>, %arg2: memref<1x2048xf32, #tpu.memory_space<vmem>>) attributes {dimension_semantics = [#tpu.dimension_semantics<parallel>], iteration_bounds = array<i64: 1>, scalar_prefetch = 0 : i64, scratch_operands = 0 : i64, tpu.core_type = #tpu.core_type<tc>, window_params = [{transform_indices = @transform_0, window_bounds = array<i64: 1, 2048>}, {transform_indices = @transform_1, window_bounds = array<i64: 1, 2048>}]} {
    %c0 = arith.constant 0 : index
    %c0_0 = arith.constant 0 : index
    %0 = vector.load %arg1[%c0, %c0_0] : memref<1x2048xf32, #tpu.memory_space<vmem>>, vector<1x2048xf32>
    %c0_1 = arith.constant 0 : index
    %c0_2 = arith.constant 0 : index
    %1 = vector.load %arg2[%c0_1, %c0_2] : memref<1x2048xf32, #tpu.memory_space<vmem>>, vector<1x2048xf32>
    tpu.vector_store %arg2[%c0_1, %c0_2], %0 {strides = array<i32>} : memref<1x2048xf32, #tpu.memory_space<vmem>>, vector<1x2048xf32>,
    return
  }
  func.func @transform_0(%arg0: i32) -> (i32, i32) {
    %c0_i32 = arith.constant 0 : i32
    %c0_i32_0 = arith.constant 0 : i32
    return %arg0, %c0_i32 : i32, i32
  }
  func.func @transform_1(%arg0: i32) -> (i32, i32) {
    %c0_i32 = arith.constant 0 : i32
    %c0_i32_0 = arith.constant 0 : i32
    return %arg0, %c0_i32 : i32, i32
  }
}

</mosaic_0001>

<llo_original>
// kernel: tpu_custom_call.1
$region0: #{tpu_custom_call.1}
  #allocation0 [shape = 'u32[]', space=smem, size = 0x4, offset = 0x4, fixed_abs, tag = 'smem constant byte address 0x4 - core index']
  #allocation1 [shape = 'u32[72,128]{1,0:T(1,128)}', space=vmem, size = 0x9000, scoped, tag = 'internal scratch']
  %s0 = inlined_call_operand.hbm [shape: f32[1,2048], index: 0, kind: input, shape index: {}]
  %s1 = inlined_call_operand.hbm [shape: f32[1,2048], index: 1, kind: output, shape index: {}]
  %s2 = sld [smem:[#allocation0]]
  $region18: #{tpu_custom_call.1} parent=0
    _
  %s4 = ssub.s32 1, %s2
  %s5 = scalar_select 0, %s4, %s2
  $region1: #{tpu_custom_call.1} parent=0
    #allocation2 [shape = 'u8[8192]{0}', space=vmem, size = 0x2000, scoped, tag = 'input window, operand 0, single buffered']
    #allocation3 [shape = 's32[1]{0}', space=sflag, size = 0x4, scoped, tag = 'scoped memory for tpu_custom_call.1']
    #allocation4 [shape = 's32[1]{0}', space=sflag, size = 0x4, scoped, tag = 'scoped memory for tpu_custom_call.1']
    #allocation5 [shape = 'u8[8192]{0}', space=vmem, size = 0x2000, scoped, tag = 'output window, operand 0, single buffered']
    %6 = vsyncpa [#allocation3], 0
    %7 = vsyncpa [#allocation4], 0
    // Predicated region
    $region2: #{tpu_custom_call.1} parent=1 // pred_check
      _
    $region3: #{tpu_custom_call.1} parent=1 // pred_check_branch
      %9 = sbr.rel (0) target = $region5
    $region4: #{tpu_custom_call.1} parent=1 // pred_region
      %11 = vsyncadd [#allocation3], 0
      %s13 = sshll.u32 %s0, 4
      %s14 = int_to_ptr.hbm [resolvable:$true] %s13
      %s15 = sshll.u32 [#allocation2], 4
      %s16 = int_to_ptr.vmem [resolvable:$true] %s15
      %18 = dma.hbm_to_vmem [thread:$0]  %s14, 256, %s16, [#allocation3]
    $region5: #{tpu_custom_call.1} parent=1 // pred_fallthru
      _
    // Predicated region
    $region6: #{tpu_custom_call.1} parent=1 // pred_check
      _
    $region7: #{tpu_custom_call.1} parent=1 // pred_check_branch
      %20 = sbr.rel (0) target = $region9
    $region8: #{tpu_custom_call.1} parent=1 // pred_region
      %22 = dma.done [#allocation3], 256
    $region9: #{tpu_custom_call.1} parent=1 // pred_fallthru
      _
    %v23 = vld [vmem:[#allocation2] sm:$0xff]
    %v24 = vld [vmem:[#allocation2 + $0x8] sm:$0xff]
    %25 = vst [vmem:[#allocation5] sm:$0xff] %v23
    %26 = vst [vmem:[#allocation5 + $0x8] sm:$0xff] %v24
    // Predicated region
    $region10: #{tpu_custom_call.1} parent=1 // pred_check
      _
    $region11: #{tpu_custom_call.1} parent=1 // pred_check_branch
      %28 = sbr.rel (0) target = $region13
    $region12: #{tpu_custom_call.1} parent=1 // pred_region
      %30 = vsyncadd [#allocation4], 0
      %s32 = sshll.u32 [#allocation5], 4
      %s33 = int_to_ptr.vmem [resolvable:$true] %s32
      %s34 = sshll.u32 %s1, 4
      %s35 = int_to_ptr.hbm [resolvable:$true] %s34
      %37 = dma.vmem_to_hbm [thread:$0]  %s33, 256, %s35, [#allocation4]
    $region13: #{tpu_custom_call.1} parent=1 // pred_fallthru
      _
    // Predicated region
    $region14: #{tpu_custom_call.1} parent=1 // pred_check
      _
    $region15: #{tpu_custom_call.1} parent=1 // pred_check_branch
      %39 = sbr.rel (0) target = $region17
    $region16: #{tpu_custom_call.1} parent=1 // pred_region
      %41 = dma.done [#allocation4], 256
    $region17: #{tpu_custom_call.1} parent=1 // pred_fallthru
      _
    %42 = vsyncpa [#allocation3], 1
    %43 = vsyncpa [#allocation4], 1

</llo_original>
